<compile_context>
chip_gen: v6e
topology: v6e:2x2x1
jax: 0.10.0
libtpu: 0.0.40
codegen_flags: <defaults>
</compile_context>

<pallas_src>
import functools

import jax
import jax.numpy as jnp
from jax import lax
from jax.experimental import pallas as pl
from jax.experimental.pallas import tpu as pltpu

_L2_EPS = 1e-12            # torch.nn.functional.normalize default epsilon
_L2_EPS_SQ = _L2_EPS * _L2_EPS


def _round_up(x, m):
    return ((x + m - 1) // m) * m


def _largest_divisor_at_most(n, cap):
    cap = max(1, min(n, cap))
    for d in range(cap, 0, -1):
        if n % d == 0:
            return d
    return 1


def _diversity_kernel(f_ref, s_ref, q_ref, g_acc, *,
                      p_total, imgs_per_block, mask_spatial):
    """One grid step: accumulate Gram partials for one image group / spatial tile.

    f_ref : (B, TP, C)  activation tile, native dtype (no HBM-side padding)
    s_ref : (1, C, C)   per-group sum_i normalized_gram_i  (written at last tile)
    q_ref : (1, 1, 1)   per-group sum_i ||normalized_gram_i||_F^2
    g_acc : (B, C, C)   f32 per-image Gram partials (VMEM scratch, reset per group)
    """
    pi = pl.program_id(1)
    np_blocks = pl.num_programs(1)
    tp = f_ref.shape[1]

    @pl.when(pi == 0)
    def _init_grams():
        g_acc[...] = jnp.zeros_like(g_acc)

    if mask_spatial:
        # Zero out-of-bounds tail rows of the (last) spatial tile before the MXU.
        rows = lax.broadcasted_iota(jnp.int32, f_ref.shape[1:], 0) + pi * tp
        valid = rows < p_total

    for b in range(imgs_per_block):          # static unroll, capped (<= 8) in wrapper
        fb = f_ref[b]                        # (TP, C), native dtype
        if mask_spatial:
            fb = jnp.where(valid, fb, jnp.zeros_like(fb))
        # f^T f via contraction on dim 0 of both operands -> MXU transposed-LHS
        # path with f32 accumulation; no explicit transpose of the (TP, C) tile.
        g_acc[b] += lax.dot_general(
            fb, fb,
            dimension_numbers=(((0,), (0,)), ((), ())),
            preferred_element_type=jnp.float32)

    @pl.when(pi == np_blocks - 1)
    def _normalize_and_write():
        # Fused normalize + group sum: per-image RMW into s_ref, no (B,C,C) temp.
        s_ref[...] = jnp.zeros_like(s_ref)
        q = jnp.zeros((1, 1, 1), jnp.float32)
        for b in range(imgs_per_block):
            g = g_acc[b]                                       # (C, C) f32
            norm_sq = jnp.sum(g * g).reshape(1, 1)
            inv = lax.rsqrt(jnp.maximum(norm_sq, _L2_EPS_SQ))  # 1 / max(||g||, eps)
            s_ref[0] += g * inv
            # ||g_n||^2 == norm_sq * inv^2 (exact incl. eps clamp; 0 for zero g).
            q = q + (norm_sq * inv * inv).reshape(1, 1, 1)
        q_ref[...] = q


def diversity_pallas(output, *, spatial_tile=1024, max_imgs_per_block=8,
                     vmem_budget_bytes=None):
    """output: (n, H, W, C) activations (channels-last). Returns scalar diversity."""
    n, h, w, c = output.shape
    p = h * w
    dsize = jnp.dtype(output.dtype).itemsize

    # Per-TensorCore VMEM capacity: size tiles per generation (64 MiB on v7x,
    # 128 MiB on v5e/v6e) and keep headroom for Mosaic internals.
    try:
        vmem_phys = int(pltpu.get_tpu_info().vmem_capacity_bytes)
    except Exception:
        vmem_phys = 128 << 20
    if not vmem_phys or vmem_phys <= 0:
        vmem_phys = 128 << 20
    vmem_cap = (40 << 20) if vmem_phys <= (64 << 20) else (64 << 20)
    budget = (vmem_budget_bytes if vmem_budget_bytes is not None
              else vmem_cap - (8 << 20))

    # VMEM footprints (lane dim padded to 128 internally; sublane dim to dtype tile).
    c_lane = _round_up(c, 128)
    c_sub = _round_up(c, 8)
    gram_bytes = c_sub * c_lane * 4          # one f32 (C, C) Gram in VMEM
    row_bytes = c_lane * dsize               # one activation row in VMEM
    sub = 8 * max(1, 4 // dsize)             # sublane alignment (8 f32 / 16 bf16)

    # Largest spatial tile (multiple of `sub`) fitting double-buffered at B=1.
    avail = max(budget - 3 * gram_bytes, 2 * sub * row_bytes)
    tile = max(sub, min(_round_up(spatial_tile, sub),
                        (avail // (2 * row_bytes)) // sub * sub))
    if _round_up(p, sub) <= tile:
        tp, num_p, mask_spatial = p, 1, False      # full spatial extent, no mask
    else:
        tp = tile
        num_p = (p + tp - 1) // tp
        mask_spatial = (p % tp) != 0               # ragged tail handled in-kernel
    tp_pad = _round_up(tp, sub)

    # Images per grid step: largest divisor of n under the VMEM budget and the
    # unroll cap; keep >= 2 groups when n >= 2 so the parallel batch axis can be
    # split across TensorCores (v7x megacore).
    per_img = 2 * tp_pad * row_bytes + gram_bytes
    b_cap = max(1, int((budget - 2 * gram_bytes) // per_img))
    b_limit = max(1, min(max_imgs_per_block, b_cap, n // 2 if n >= 2 else 1))
    b_imgs = _largest_divisor_at_most(n, b_limit)
    num_groups = n // b_imgs

    flat = output.reshape(n, p, c)            # native dtype, no pad / no HBM copy

    used = (2 * b_imgs * tp_pad * row_bytes   # double-buffered input block
            + b_imgs * gram_bytes             # g_acc scratch
            + 2 * gram_bytes                  # double-buffered S output block
            + (1 << 12))                      # q output block (tiny)
    vmem_limit = int(min(max(used + (6 << 20), 16 << 20), vmem_cap))

    kernel = functools.partial(_diversity_kernel,
                               p_total=p, imgs_per_block=b_imgs,
                               mask_spatial=mask_spatial)

    # TODO(synk): on v5e, optionally cast f32 tiles to bf16 in-kernel before the
    # dot_general (f32 accumulate) to halve DMA bytes and boost MXU rate.
    s_parts, q_parts = pl.pallas_call(
        kernel,
        out_shape=(jax.ShapeDtypeStruct((num_groups, c, c), jnp.float32),
                   jax.ShapeDtypeStruct((num_groups, 1, 1), jnp.float32)),
        grid_spec=pltpu.PrefetchScalarGridSpec(
            num_scalar_prefetch=0,
            grid=(num_groups, num_p),
            in_specs=[pl.BlockSpec((b_imgs, tp, c),
                                   lambda bi, pi: (bi, pi, 0))],
            out_specs=[pl.BlockSpec((1, c, c), lambda bi, pi: (bi, 0, 0)),
                       pl.BlockSpec((1, 1, 1), lambda bi, pi: (bi, 0, 0))],
            scratch_shapes=[pltpu.VMEM((b_imgs, c, c), jnp.float32)],
        ),
        compiler_params=pltpu.CompilerParams(
            dimension_semantics=("parallel", "arbitrary"),
            vmem_limit_bytes=vmem_limit,
        ),
    )(flat)

    # Tiny combine: sum_{i != j} <g_i, g_j> = ||sum_i g_i||_F^2 - sum_i ||g_i||^2.
    s = jnp.sum(s_parts, axis=0)
    total = jnp.sum(s * s) - jnp.sum(q_parts)
    return total / float(n)


class Diversity:
    """JAX/Pallas equivalent of the PyTorch Diversity module."""

    def __init__(self, t, name=0):
        self.t = t
        self.name = name

    def __call__(self, inputs):
        # `inputs` is ignored, exactly as in the PyTorch forward.
        return diversity_pallas(self.t(self.name))


def _diversity_ref(output):
    """Pure-JAX reference matching the PyTorch forward semantics."""
    n = output.shape[0]
    c = output.shape[-1]
    flattened = output.reshape(n, -1, c).astype(jnp.float32)
    grams = jnp.einsum("npa,npb->nab", flattened, flattened)
    norms = jnp.sqrt(jnp.sum(grams * grams, axis=(1, 2), keepdims=True))
    grams = grams / jnp.maximum(norms, _L2_EPS)
    total = 0.0
    for i in range(n):
        for j in range(n):
            if j != i:
                total = total + jnp.sum(grams[i] * grams[j])
    return total / n


if __name__ == "__main__":
    key = jax.random.PRNGKey(0)
    k1, k2, k3 = jax.random.split(key, 3)

    # Test 1: (4, 8, 8, 16) f32 -- C=16 with no channel padding, 2 groups of 2.
    act1 = jax.random.normal(k1, (4, 8, 8, 16), dtype=jnp.float32)
    dummy_inputs = jnp.zeros((4, 3, 32, 32), dtype=jnp.float32)   # ignored
    module = Diversity(lambda name: act1, name="mixed4a")
    res1 = jax.block_until_ready(module(dummy_inputs))
    ref1 = jax.block_until_ready(_diversity_ref(act1))
    assert jnp.allclose(res1, ref1, rtol=1e-4, atol=1e-5), (res1, ref1)

    # Test 2: spatial tiling with ragged tail (P=640, TP=256 -> 3 tiles, in-kernel mask).
    act2 = jax.random.normal(k2, (3, 40, 16, 20), dtype=jnp.float32)
    res2 = jax.block_until_ready(diversity_pallas(act2, spatial_tile=256))
    ref2 = jax.block_until_ready(_diversity_ref(act2))
    assert jnp.allclose(res2, ref2, rtol=1e-4, atol=1e-5), (res2, ref2)

    # Test 3: several batch groups (n=6, 2 imgs/step -> 3 partial outputs), odd P=100.
    act3 = jax.random.normal(k3, (6, 10, 10, 16), dtype=jnp.float32)
    res3 = jax.block_until_ready(diversity_pallas(act3, max_imgs_per_block=2))
    ref3 = jax.block_until_ready(_diversity_ref(act3))
    assert jnp.allclose(res3, ref3, rtol=1e-4, atol=1e-5), (res3, ref3)

    # Test 4: native bf16 streaming (no wrapper f32 cast; MXU f32 accumulate).
    act4 = act1.astype(jnp.bfloat16)
    res4 = jax.block_until_ready(diversity_pallas(act4))
    ref4 = jax.block_until_ready(_diversity_ref(act4))
    assert jnp.allclose(res4, ref4, rtol=2e-2, atol=2e-2), (res4, ref4)

    print("KERNEL_OK")
</pallas_src>

<mosaic_0001>
module attributes {stable_mosaic.version = 11 : i64} {
  func.func @_diversity_kernel(%arg0: i32, %arg1: i32, %arg2: memref<2x64x16xf32, #tpu.memory_space<vmem>>, %arg3: memref<1x16x16xf32, #tpu.memory_space<vmem>>, %arg4: memref<1x1x1xf32, #tpu.memory_space<vmem>>, %arg5: memref<2x16x16xf32, #tpu.memory_space<vmem>>) attributes {dimension_semantics = [#tpu.dimension_semantics<parallel>, #tpu.dimension_semantics<arbitrary>], iteration_bounds = array<i64: 2, 1>, scalar_prefetch = 0 : i64, scratch_operands = 1 : i64, tpu.core_type = #tpu.core_type<tc>, window_params = [{transform_indices = @transform_0, window_bounds = array<i64: 2, 64, 16>}, {transform_indices = @transform_1, window_bounds = array<i64: 1, 16, 16>}, {transform_indices = @transform_2, window_bounds = array<i64: 1, 1, 1>}]} {
    %c0_i32 = arith.constant 0 : i32
    %0 = arith.cmpi eq, %arg1, %c0_i32 : i32
    %1 = arith.extui %0 : i1 to i32
    %c0_i32_0 = arith.constant 0 : i32
    %2 = arith.cmpi ne, %1, %c0_i32_0 : i32
    scf.if %2 {
      %cst_20 = arith.constant 0.000000e+00 : f32
      %24 = vector.broadcast %cst_20 : f32 to vector<2x16x16xf32>
      %c0_21 = arith.constant 0 : index
      %c0_22 = arith.constant 0 : index
      %c0_23 = arith.constant 0 : index
      %25 = vector.load %arg5[%c0_21, %c0_22, %c0_23] : memref<2x16x16xf32, #tpu.memory_space<vmem>>, vector<2x16x16xf32>
      tpu.vector_store %arg5[%c0_21, %c0_22, %c0_23], %24 {strides = array<i32>} : memref<2x16x16xf32, #tpu.memory_space<vmem>>, vector<2x16x16xf32>,
    } else {
    }
    %c0 = arith.constant 0 : index
    %c0_1 = arith.constant 0 : index
    %c0_2 = arith.constant 0 : index
    %3 = vector.load %arg2[%c0, %c0_1, %c0_2] : memref<2x64x16xf32, #tpu.memory_space<vmem>>, vector<1x64x16xf32>
    %4 = vector.shape_cast %3 : vector<1x64x16xf32> to vector<64x16xf32>
    %c0_3 = arith.constant 0 : index
    %c0_4 = arith.constant 0 : index
    %c0_5 = arith.constant 0 : index
    %5 = vector.load %arg5[%c0_3, %c0_4, %c0_5] : memref<2x16x16xf32, #tpu.memory_space<vmem>>, vector<1x16x16xf32>
    %6 = vector.shape_cast %5 : vector<1x16x16xf32> to vector<16x16xf32>
    %cst = arith.constant dense<0.000000e+00> : vector<16x16xf32>
    %7 = tpu.matmul %4, %4, %cst {dimension_numbers = #tpu.dot_dimension_numbers<[0], [0], [1], [1], [0, 1, 1, 1], [], []>} : vector<64x16xf32>, vector<64x16xf32>, vector<16x16xf32> -> vector<16x16xf32>
    %8 = arith.addf %6, %7 : vector<16x16xf32>
    %c0_6 = arith.constant 0 : index
    %c0_7 = arith.constant 0 : index
    %c0_8 = arith.constant 0 : index
    %9 = vector.load %arg5[%c0_6, %c0_7, %c0_8] : memref<2x16x16xf32, #tpu.memory_space<vmem>>, vector<1x16x16xf32>
    %10 = vector.shape_cast %9 : vector<1x16x16xf32> to vector<16x16xf32>
    %11 = vector.shape_cast %8 : vector<16x16xf32> to vector<1x16x16xf32>
    tpu.vector_store %arg5[%c0_6, %c0_7, %c0_8], %11 {strides = array<i32>} : memref<2x16x16xf32, #tpu.memory_space<vmem>>, vector<1x16x16xf32>,
    %c1 = arith.constant 1 : index
    %c0_9 = arith.constant 0 : index
    %c0_10 = arith.constant 0 : index
    %12 = vector.load %arg2[%c1, %c0_9, %c0_10] : memref<2x64x16xf32, #tpu.memory_space<vmem>>, vector<1x64x16xf32>
    %13 = vector.shape_cast %12 : vector<1x64x16xf32> to vector<64x16xf32>
    %c1_11 = arith.constant 1 : index
    %c0_12 = arith.constant 0 : index
    %c0_13 = arith.constant 0 : index
    %14 = vector.load %arg5[%c1_11, %c0_12, %c0_13] : memref<2x16x16xf32, #tpu.memory_space<vmem>>, vector<1x16x16xf32>
    %15 = vector.shape_cast %14 : vector<1x16x16xf32> to vector<16x16xf32>
    %cst_14 = arith.constant dense<0.000000e+00> : vector<16x16xf32>
    %16 = tpu.matmul %13, %13, %cst_14 {dimension_numbers = #tpu.dot_dimension_numbers<[0], [0], [1], [1], [0, 1, 1, 1], [], []>} : vector<64x16xf32>, vector<64x16xf32>, vector<16x16xf32> -> vector<16x16xf32>
    %17 = arith.addf %15, %16 : vector<16x16xf32>
    %c1_15 = arith.constant 1 : index
    %c0_16 = arith.constant 0 : index
    %c0_17 = arith.constant 0 : index
    %18 = vector.load %arg5[%c1_15, %c0_16, %c0_17] : memref<2x16x16xf32, #tpu.memory_space<vmem>>, vector<1x16x16xf32>
    %19 = vector.shape_cast %18 : vector<1x16x16xf32> to vector<16x16xf32>
    %20 = vector.shape_cast %17 : vector<16x16xf32> to vector<1x16x16xf32>
    tpu.vector_store %arg5[%c1_15, %c0_16, %c0_17], %20 {strides = array<i32>} : memref<2x16x16xf32, #tpu.memory_space<vmem>>, vector<1x16x16xf32>,
    %c0_i32_18 = arith.constant 0 : i32
    %21 = arith.cmpi eq, %arg1, %c0_i32_18 : i32
    %22 = arith.extui %21 : i1 to i32
    %c0_i32_19 = arith.constant 0 : i32
    %23 = arith.cmpi ne, %22, %c0_i32_19 : i32
    scf.if %23 {
      %cst_20 = arith.constant 0.000000e+00 : f32
      %24 = vector.broadcast %cst_20 : f32 to vector<1x16x16xf32>
      %c0_21 = arith.constant 0 : index
      %c0_22 = arith.constant 0 : index
      %c0_23 = arith.constant 0 : index
      %25 = vector.load %arg3[%c0_21, %c0_22, %c0_23] : memref<1x16x16xf32, #tpu.memory_space<vmem>>, vector<1x16x16xf32>
      tpu.vector_store %arg3[%c0_21, %c0_22, %c0_23], %24 {strides = array<i32>} : memref<1x16x16xf32, #tpu.memory_space<vmem>>, vector<1x16x16xf32>,
      %cst_24 = arith.constant 0.000000e+00 : f32
      %26 = vector.broadcast %cst_24 : f32 to vector<1x1x1xf32>
      %c0_25 = arith.constant 0 : index
      %c0_26 = arith.constant 0 : index
      %c0_27 = arith.constant 0 : index
      %27 = vector.load %arg5[%c0_25, %c0_26, %c0_27] : memref<2x16x16xf32, #tpu.memory_space<vmem>>, vector<1x16x16xf32>
      %28 = vector.shape_cast %27 : vector<1x16x16xf32> to vector<16x16xf32>
      %29 = arith.mulf %28, %28 : vector<16x16xf32>
      %30 = vector.shape_cast %29 : vector<16x16xf32> to vector<1x16x16xf32>
      %cst_28 = arith.constant dense<0.000000e+00> : vector<1xf32>
      %31 = vector.multi_reduction <add>, %30, %cst_28 [1, 2] : vector<1x16x16xf32> to vector<1xf32>
      %32 = vector.shape_cast %31 : vector<1xf32> to vector<1x1x1xf32>
      %33 = vector.extract %32[0, 0, 0] : f32 from vector<1x1x1xf32>
      %34 = vector.broadcast %33 : f32 to vector<1x1xf32>
      %cst_29 = arith.constant 1.000000e-24 : f32
      %35 = vector.broadcast %cst_29 : f32 to vector<1x1xf32>
      %36 = arith.maximumf %34, %35 : vector<1x1xf32>
      %37 = math.rsqrt %36 : vector<1x1xf32>
      %c0_30 = arith.constant 0 : index
      %c0_31 = arith.constant 0 : index
      %c0_32 = arith.constant 0 : index
      %38 = vector.load %arg3[%c0_30, %c0_31, %c0_32] : memref<1x16x16xf32, #tpu.memory_space<vmem>>, vector<1x16x16xf32>
      %39 = vector.shape_cast %38 : vector<1x16x16xf32> to vector<16x16xf32>
      %40 = vector.broadcast %37 : vector<1x1xf32> to vector<16x16xf32>
      %41 = arith.mulf %28, %40 : vector<16x16xf32>
      %42 = arith.addf %39, %41 : vector<16x16xf32>
      %c0_33 = arith.constant 0 : index
      %c0_34 = arith.constant 0 : index
      %c0_35 = arith.constant 0 : index
      %43 = vector.load %arg3[%c0_33, %c0_34, %c0_35] : memref<1x16x16xf32, #tpu.memory_space<vmem>>, vector<1x16x16xf32>
      %44 = vector.shape_cast %43 : vector<1x16x16xf32> to vector<16x16xf32>
      %45 = vector.shape_cast %42 : vector<16x16xf32> to vector<1x16x16xf32>
      tpu.vector_store %arg3[%c0_33, %c0_34, %c0_35], %45 {strides = array<i32>} : memref<1x16x16xf32, #tpu.memory_space<vmem>>, vector<1x16x16xf32>,
      %46 = arith.mulf %34, %37 : vector<1x1xf32>
      %47 = arith.mulf %46, %37 : vector<1x1xf32>
      %48 = vector.shape_cast %47 : vector<1x1xf32> to vector<1x1x1xf32>
      %49 = arith.addf %26, %48 : vector<1x1x1xf32>
      %c1_36 = arith.constant 1 : index
      %c0_37 = arith.constant 0 : index
      %c0_38 = arith.constant 0 : index
      %50 = vector.load %arg5[%c1_36, %c0_37, %c0_38] : memref<2x16x16xf32, #tpu.memory_space<vmem>>, vector<1x16x16xf32>
      %51 = vector.shape_cast %50 : vector<1x16x16xf32> to vector<16x16xf32>
      %52 = arith.mulf %51, %51 : vector<16x16xf32>
      %53 = vector.shape_cast %52 : vector<16x16xf32> to vector<1x16x16xf32>
      %cst_39 = arith.constant dense<0.000000e+00> : vector<1xf32>
      %54 = vector.multi_reduction <add>, %53, %cst_39 [1, 2] : vector<1x16x16xf32> to vector<1xf32>
      %55 = vector.shape_cast %54 : vector<1xf32> to vector<1x1x1xf32>
      %56 = vector.extract %55[0, 0, 0] : f32 from vector<1x1x1xf32>
      %57 = vector.broadcast %56 : f32 to vector<1x1xf32>
      %cst_40 = arith.constant 1.000000e-24 : f32
      %58 = vector.broadcast %cst_40 : f32 to vector<1x1xf32>
      %59 = arith.maximumf %57, %58 : vector<1x1xf32>
      %60 = math.rsqrt %59 : vector<1x1xf32>
      %c0_41 = arith.constant 0 : index
      %c0_42 = arith.constant 0 : index
      %c0_43 = arith.constant 0 : index
      %61 = vector.load %arg3[%c0_41, %c0_42, %c0_43] : memref<1x16x16xf32, #tpu.memory_space<vmem>>, vector<1x16x16xf32>
      %62 = vector.shape_cast %61 : vector<1x16x16xf32> to vector<16x16xf32>
      %63 = vector.broadcast %60 : vector<1x1xf32> to vector<16x16xf32>
      %64 = arith.mulf %51, %63 : vector<16x16xf32>
      %65 = arith.addf %62, %64 : vector<16x16xf32>
      %c0_44 = arith.constant 0 : index
      %c0_45 = arith.constant 0 : index
      %c0_46 = arith.constant 0 : index
      %66 = vector.load %arg3[%c0_44, %c0_45, %c0_46] : memref<1x16x16xf32, #tpu.memory_space<vmem>>, vector<1x16x16xf32>
      %67 = vector.shape_cast %66 : vector<1x16x16xf32> to vector<16x16xf32>
      %68 = vector.shape_cast %65 : vector<16x16xf32> to vector<1x16x16xf32>
      tpu.vector_store %arg3[%c0_44, %c0_45, %c0_46], %68 {strides = array<i32>} : memref<1x16x16xf32, #tpu.memory_space<vmem>>, vector<1x16x16xf32>,
      %69 = arith.mulf %57, %60 : vector<1x1xf32>
      %70 = arith.mulf %69, %60 : vector<1x1xf32>
      %71 = vector.shape_cast %70 : vector<1x1xf32> to vector<1x1x1xf32>
      %72 = arith.addf %49, %71 : vector<1x1x1xf32>
      %c0_47 = arith.constant 0 : index
      %c0_48 = arith.constant 0 : index
      %c0_49 = arith.constant 0 : index
      %73 = vector.load %arg4[%c0_47, %c0_48, %c0_49] : memref<1x1x1xf32, #tpu.memory_space<vmem>>, vector<1x1x1xf32>
      tpu.vector_store %arg4[%c0_47, %c0_48, %c0_49], %72 {strides = array<i32>} : memref<1x1x1xf32, #tpu.memory_space<vmem>>, vector<1x1x1xf32>,
    } else {
    }
    return
  }
  func.func @transform_0(%arg0: i32, %arg1: i32) -> (i32, i32, i32) {
    %c0_i32 = arith.constant 0 : i32
    %c0_i32_0 = arith.constant 0 : i32
    return %arg0, %arg1, %c0_i32 : i32, i32, i32
  }
  func.func @transform_1(%arg0: i32, %arg1: i32) -> (i32, i32, i32) {
    %c0_i32 = arith.constant 0 : i32
    %c0_i32_0 = arith.constant 0 : i32
    %c0_i32_1 = arith.constant 0 : i32
    return %arg0, %c0_i32, %c0_i32_0 : i32, i32, i32
  }
  func.func @transform_2(%arg0: i32, %arg1: i32) -> (i32, i32, i32) {
    %c0_i32 = arith.constant 0 : i32
    %c0_i32_0 = arith.constant 0 : i32
    %c0_i32_1 = arith.constant 0 : i32
    return %arg0, %c0_i32, %c0_i32_0 : i32, i32, i32
  }
}

</mosaic_0001>

<llo_original>
// kernel: tpu_custom_call.1
$region0: #{tpu_custom_call.1}
  #allocation0 [shape = 'u32[]', space=smem, size = 0x4, offset = 0x4, fixed_abs, tag = 'smem constant byte address 0x4 - core index']
  #allocation1 [shape = 'u32[144,128]{1,0:T(1,128)}', space=vmem, size = 0x12000, scoped, tag = 'internal scratch']
  #allocation2 [shape = 'f32[2,16,16]{2,1,0:T(8,128)}', space=vmem, size = 0x4000, scoped, tag = 'scratch operand']
  %s0 = inlined_call_operand.vmem [shape: f32[4,64,16], index: 0, kind: input, shape index: {}]
  %s1 = inlined_call_operand.hbm [shape: f32[2,16,16], index: 1, kind: output, shape index: {0}]
  %s2 = inlined_call_operand.vmem [shape: f32[2,1,1], index: 2, kind: output, shape index: {1}]
  %3 = xla_tuple %s1, %s2
  %s4 = sld [smem:[#allocation0]]
  $region53: #{tpu_custom_call.1} parent=0
    _
  %s6 = ssub.s32 1, %s4
  %s7 = scalar_select 0, %s6, %s4
  $region1: #{tpu_custom_call.1} parent=0
    #allocation3 [shape = 'u8[16384]{0}', space=vmem, size = 0x4000, scoped, tag = 'output window, operand 0']
    #allocation4 [shape = 's32[2]{0}', space=sflag, size = 0x8, scoped, tag = 'scoped memory for tpu_custom_call.1']
    %8 = vsyncpa [#allocation4], 0
    %s9 = scalar_lea.sflag [#allocation4], 1
    %10 = vsyncpa %s9, 0
    loop: start=0, step=1, limit=4
    $region2: #{tpu_custom_call.1} parent=1 // loop_pre_header
      _
    $region3: #{tpu_custom_call.1} parent=1 // loop_header
      %s12 = sphi 0, %s16
      %p13 = scmp.ge.s32.totalorder %s12, 4
      %s19 = sphi 0, %s31
      %s20 = sphi 0, %s27
      %s21 = sphi 0, %s19
      %s22 = sphi 0, %s20
      %s23 = sphi 0, %s21
      %s24 = sphi 0, %s22
      %s36 = sphi 0, %s38
      %s39 = sphi 0, %s36
      %s40 = sphi 0, %s39
      %s56 = sphi 0, %s40
      %s62 = sphi 0, %s64
      %s65 = sphi 0, %s62
      %s66 = sphi 0, %s65
      %s82 = sphi 0, %s66
      %s88 = sphi 0, %s90
      %s91 = sphi 0, %s88
      %s92 = sphi 0, %s91
      %s108 = sphi 0, %s92
    $region4: #{tpu_custom_call.1} parent=1 // loop_header_branch
      %15 = sbr.rel (%p13) target = $region8
    $region5: #{tpu_custom_call.1} parent=1 // loop_body
      %s17 = ssub.s32 %s12, 1
      %s18 = ssub.s32 %s12, 2
      %s25 = sadd.s32 1, %s20
      %p26 = scmp.ge.s32.totalorder %s25, 1
      %s27 = scalar_select %p26, 0, %s25
      %s28 = sadd.s32 1, %s19
      %s29 = scalar_select %p26, %s28, %s19
      %p30 = scmp.ge.s32.totalorder %s29, 2
      %s31 = scalar_select %p30, 0, %s29
      %s32 = ssub.s32 %s19, %s31
      %s33 = ssub.s32 %s20, %s27
      %s34 = sor.u32 %s32, %s33
      %p35 = scmp.eq.s32.totalorder %s34, 0
      %s37 = sadd.s32 %s36, 1
      %s38 = scalar_select %p35, %s36, %s37
      %p41 = pneg %p35
      %p42 = scmp.eq.s32.totalorder %s12, 1
      %p43 = por %p41, %p42
      %p44 = scmp.ne.s32.totalorder %s36, %s39
      %p45 = scmp.eq.s32.totalorder %s12, 0
      %p46 = por %p44, %p45
      %p47 = scmp.ne.s32.totalorder %s36, %s39
      %p48 = scmp.eq.s32.totalorder %s17, 1
      %p49 = por %p47, %p48
      %p50 = scmp.ne.s32.totalorder %s39, %s40
      %p51 = scmp.eq.s32.totalorder %s17, 0
      %p52 = por %p50, %p51
      %p53 = scmp.ne.s32.totalorder %s39, %s40
      %p54 = scmp.eq.s32.totalorder %s18, 1
      %p55 = por %p53, %p54
      %p57 = scmp.ne.s32.totalorder %s40, %s56
      %p58 = scmp.eq.s32.totalorder %s18, 0
      %p59 = por %p57, %p58
      %s60 = ssub.s32 %s19, %s31
      %p61 = scmp.eq.s32.totalorder %s60, 0
      %s63 = sadd.s32 %s62, 1
      %s64 = scalar_select %p61, %s62, %s63
      %p67 = pneg %p61
      %p68 = scmp.eq.s32.totalorder %s12, 1
      %p69 = por %p67, %p68
      %p70 = scmp.ne.s32.totalorder %s62, %s65
      %p71 = scmp.eq.s32.totalorder %s12, 0
      %p72 = por %p70, %p71
      %p73 = scmp.ne.s32.totalorder %s62, %s65
      %p74 = scmp.eq.s32.totalorder %s17, 1
      %p75 = por %p73, %p74
      %p76 = scmp.ne.s32.totalorder %s65, %s66
      %p77 = scmp.eq.s32.totalorder %s17, 0
      %p78 = por %p76, %p77
      %p79 = scmp.ne.s32.totalorder %s65, %s66
      %p80 = scmp.eq.s32.totalorder %s18, 1
      %p81 = por %p79, %p80
      %p83 = scmp.ne.s32.totalorder %s66, %s82
      %p84 = scmp.eq.s32.totalorder %s18, 0
      %p85 = por %p83, %p84
      %s86 = ssub.s32 %s19, %s31
      %p87 = scmp.eq.s32.totalorder %s86, 0
      %s89 = sadd.s32 %s88, 1
      %s90 = scalar_select %p87, %s88, %s89
      %p93 = pneg %p87
      %p94 = scmp.eq.s32.totalorder %s12, 1
      %p95 = por %p93, %p94
      %p96 = scmp.ne.s32.totalorder %s88, %s91
      %p97 = scmp.eq.s32.totalorder %s12, 0
      %p98 = por %p96, %p97
      %p99 = scmp.ne.s32.totalorder %s88, %s91
      %p100 = scmp.eq.s32.totalorder %s17, 1
      %p101 = por %p99, %p100
      %p102 = scmp.ne.s32.totalorder %s91, %s92
      %p103 = scmp.eq.s32.totalorder %s17, 0
      %p104 = por %p102, %p103
      %p105 = scmp.ne.s32.totalorder %s91, %s92
      %p106 = scmp.eq.s32.totalorder %s18, 1
      %p107 = por %p105, %p106
      %p109 = scmp.ne.s32.totalorder %s92, %s108
      %p110 = scmp.eq.s32.totalorder %s18, 0
      %p111 = por %p109, %p110
      %p112 = scmp.le.s32.totalorder 1, %s12
      %p113 = scmp.lt.s32.totalorder %s12, 3
      %p114 = pnand %p112, %p113
      %p115 = pneg %p114
      // Predicated region
      $region9: #{tpu_custom_call.1} parent=5 // pred_check
        _
      $region10: #{tpu_custom_call.1} parent=5 // pred_check_branch
        %117 = sbr.rel (%p114) target = $region12
      $region11: #{tpu_custom_call.1} parent=5 // pred_region
        %s118 = ssub.s32 %s12, 1
      $region12: #{tpu_custom_call.1} parent=5 // pred_fallthru
        _
      %p119 = scmp.lt.s32.totalorder %s12, 2
      // Predicated region
      $region13: #{tpu_custom_call.1} parent=5 // pred_check
        %p120 = pneg %p119
      $region14: #{tpu_custom_call.1} parent=5 // pred_check_branch
        %122 = sbr.rel (%p120) target = $region16
      $region15: #{tpu_custom_call.1} parent=5 // pred_region
        // Predicated region
        $region17: #{tpu_custom_call.1} parent=15 // pred_check
          %p123 = pneg %p46
        $region18: #{tpu_custom_call.1} parent=15 // pred_check_branch
          %125 = sbr.rel (%p123) target = $region20
        $region19: #{tpu_custom_call.1} parent=15 // pred_region
          %s126 = smul.u32 2, %s19
          %s127 = smul.u32 8, %s20
          %p128 = scmp.lt.s32.totalorder %s126, 3
          %s129 = scalar_select %p128, %s126, 3
          %p130 = scmp.lt.s32.totalorder %s127, 7
          %s131 = scalar_select %p130, %s127, 7
          %s132 = smul.addr %s129, 8
          %s133 = sadd.s32 %s131, %s132
          %s134 = smul.addr %s133, 8
          %s135 = scalar_lea.vmem %s0, %s134
          %s136 = smul.u32 2, %s19
          %s137 = smul.u32 8, %s20
        $region20: #{tpu_custom_call.1} parent=15 // pred_fallthru
          _
      $region16: #{tpu_custom_call.1} parent=5 // pred_fallthru
        _
      %p138 = scmp.le.s32.totalorder 1, %s12
      %p139 = scmp.lt.s32.totalorder %s12, 3
      %p140 = pnand %p138, %p139
      %p141 = pneg %p140
      // Predicated region
      $region21: #{tpu_custom_call.1} parent=5 // pred_check
        _
      $region22: #{tpu_custom_call.1} parent=5 // pred_check_branch
        %143 = sbr.rel (%p140) target = $region24
      $region23: #{tpu_custom_call.1} parent=5 // pred_region
        %s144 = ssub.s32 %s12, 1
        %s145 = smul.u32 2, %s21
        %s146 = smul.u32 8, %s22
        %p147 = scmp.lt.s32.totalorder %s145, 3
        %s148 = scalar_select %p147, %s145, 3
        %p149 = scmp.lt.s32.totalorder %s146, 7
        %s150 = scalar_select %p149, %s146, 7
        %s151 = smul.addr %s148, 8
        %s152 = sadd.s32 %s150, %s151
        %s153 = smul.addr %s152, 8
        %s154 = scalar_lea.vmem %s0, %s153
        %p155 = pneg %p52
        %p156 = pneg %p49
        %p157 = pneg %p78
        %p158 = pneg %p75
        %s159 = sand.u32 %s65, 1
        %s160 = scalar_lea.sflag [#allocation4], %s159
        %s161 = sand.u32 %s65, 1
        %s162 = smul.addr %s161, 16
        %s163 = scalar_lea.vmem [#allocation3], %s162
        %p164 = pneg %p104
        %p165 = pneg %p101
        %p166 = scmp.lt.s32.totalorder %s21, 1
        %s167 = scalar_select %p166, %s21, 1
        %s168 = scalar_lea.vmem %s2, %s167
        %s169 = smul.u32 2, %s21
        %s170 = smul.u32 8, %s22
        %p171 = scmp.lt.s32.totalorder %s169, 3
        %s172 = scalar_select %p171, %s169, 3
        %p173 = scmp.lt.s32.totalorder %s170, 7
        %s174 = scalar_select %p173, %s170, 7
        %s175 = smul.addr %s172, 8
        %s176 = sadd.s32 %s174, %s175
        %s177 = smul.addr %s176, 8
        %s178 = scalar_lea.vmem %s0, %s177
        %s179 = smul.u32 2, %s21
        %s180 = smul.u32 8, %s22
        %p181 = scmp.lt.s32.totalorder %s21, 1
        %s182 = scalar_select %p181, %s21, 1
        %s183 = scalar_lea.vmem %s2, %s182
        %p184 = scmp.eq.s32.totalorder %s22, 0
        // Predicated region
        $region25: #{tpu_custom_call.1} parent=23 // pred_check
          %p185 = pneg %p184
        $region26: #{tpu_custom_call.1} parent=23 // pred_check_branch
          %187 = sbr.rel (%p185) target = $region28
        $region27: #{tpu_custom_call.1} parent=23 // pred_region
          %vm188 = vcmask 130048
          %189 = vst.msk [vmem:[#allocation2] sm:$0xff] %vm188, 0.0
          %190 = vst.msk [vmem:[#allocation2 + $0x8] sm:$0xff] %vm188, 0.0
          %191 = vst.msk [vmem:[#allocation2 + $0x10] sm:$0xff] %vm188, 0.0
          %192 = vst.msk [vmem:[#allocation2 + $0x18] sm:$0xff] %vm188, 0.0
        $region28: #{tpu_custom_call.1} parent=23 // pred_fallthru
          _
        %v193 = vld [vmem:[%s178] sm:$0xff]
        %v194 = vld [vmem:[%s178 + $0x8] sm:$0xff]
        %v195 = vld [vmem:[%s178 + $0x10] sm:$0xff]
        %v196 = vld [vmem:[%s178 + $0x18] sm:$0xff]
        %v197 = vld [vmem:[%s178 + $0x20] sm:$0xff]
        %v198 = vld [vmem:[%s178 + $0x28] sm:$0xff]
        %v199 = vld [vmem:[%s178 + $0x30] sm:$0xff]
        %v200 = vld [vmem:[%s178 + $0x38] sm:$0xff]
        %v201 = vld [vmem:[#allocation2] sm:$0xff]
        %v202 = vld [vmem:[#allocation2 + $0x8] sm:$0xff]
        %203 = vxpose.xlu0.b32.start [1/16] %v193, 128
        %204 = vxpose.xlu0.b32.cont [2/16] %v194, 128
        %205 = vxpose.xlu0.b32.cont [3/16] %v195, 128
        %206 = vxpose.xlu0.b32.cont [4/16] %v196, 128
        %207 = vxpose.xlu0.b32.cont [5/16] %v197, 128
        %208 = vxpose.xlu0.b32.cont [6/16] %v198, 128
        %209 = vxpose.xlu0.b32.cont [7/16] %v199, 128
        %210 = vxpose.xlu0.b32.cont [8/16] %v200, 128
        %211 = vxpose.xlu0.b32.cont [9/16] 0.0, 128
        %212 = vxpose.xlu0.b32.cont [10/16] 0.0, 128
        %213 = vxpose.xlu0.b32.cont [11/16] 0.0, 128
        %214 = vxpose.xlu0.b32.cont [12/16] 0.0, 128
        %215 = vxpose.xlu0.b32.cont [13/16] 0.0, 128
        %216 = vxpose.xlu0.b32.cont [14/16] 0.0, 128
        %217 = vxpose.xlu0.b32.cont [15/16] 0.0, 128
        %218 = vxpose.xlu0.b32.end [16/16] 0.0, 128
        %v219 = vpop.trf.xlu0
        %v220 = vpop.trf.xlu0
        %v221 = vpop.trf.xlu0
        %v222 = vpop.trf.xlu0
        %v223 = vpop.trf.xlu0
        %v224 = vpop.trf.xlu0
        %v225 = vpop.trf.xlu0
        %v226 = vpop.trf.xlu0
        %v227 = vpop.trf.xlu0
        %v228 = vpop.trf.xlu0
        %v229 = vpop.trf.xlu0
        %v230 = vpop.trf.xlu0
        %v231 = vpop.trf.xlu0
        %v232 = vpop.trf.xlu0
        %v233 = vpop.trf.xlu0
        %v234 = vpop.trf.xlu0
        %vm235 = vcmask 523264
        %v237 = vsel %vm235, %v219, 0
        %v240 = vsel %vm235, %v220, 0
        %242 = vmatprep.subr.mxu0 0.0
        %243 = vmatpush1.msra.mxu0 0.0
        %244 = vmatprep.subr.mxu0 0.0
        %245 = vmatpush1.msra.mxu0 0.0
        %246 = vmatprep.subr.mxu0 0.0
        %247 = vmatpush1.msra.mxu0 0.0
        %248 = vmatprep.subr.mxu0 0.0
        %249 = vmatpush1.msra.mxu0 0.0
        %250 = vmatprep.subr.mxu0 0.0
        %251 = vmatpush1.msra.mxu0 0.0
        %252 = vmatprep.subr.mxu0 0.0
        %253 = vmatpush1.msra.mxu0 0.0
        %254 = vmatprep.subr.mxu0 0.0
        %255 = vmatpush1.msra.mxu0 0.0
        %256 = vmatprep.subr.mxu0 0.0
        %257 = vmatpush1.msra.mxu0 0.0
        %258 = vmatprep.subr.mxu0 0.0
        %259 = vmatpush1.msra.mxu0 %v200
        %260 = vmatprep.subr.mxu0 0.0
        %261 = vmatpush1.msra.mxu0 %v199
        %262 = vmatprep.subr.mxu0 0.0
        %263 = vmatpush1.msra.mxu0 %v198
        %264 = vmatprep.subr.mxu0 0.0
        %265 = vmatpush1.msra.mxu0 %v197
        %266 = vmatprep.subr.mxu0 0.0
        %267 = vmatpush1.msra.mxu0 %v196
        %268 = vmatprep.subr.mxu0 0.0
        %269 = vmatpush1.msra.mxu0 %v195
        %270 = vmatprep.subr.mxu0 0.0
        %271 = vmatpush1.msra.mxu0 %v194
        %272 = vmatprep.subr.mxu0 0.0
        %273 = vmatpush1.msra.mxu0 %v193
        %274 = vmatprep.subr.mxu0 0.0
        %275 = vmatpush2.msra.mxu0 0.0
        %276 = vmatprep.subr.mxu0 0.0
        %277 = vmatpush2.msra.mxu0 0.0
        %278 = vmatprep.subr.mxu0 0.0
        %279 = vmatpush2.msra.mxu0 0.0
        %280 = vmatprep.subr.mxu0 0.0
        %281 = vmatpush2.msra.mxu0 0.0
        %282 = vmatprep.subr.mxu0 0.0
        %283 = vmatpush2.msra.mxu0 0.0
        %284 = vmatprep.subr.mxu0 0.0
        %285 = vmatpush2.msra.mxu0 0.0
        %286 = vmatprep.subr.mxu0 0.0
        %287 = vmatpush2.msra.mxu0 0.0
        %288 = vmatprep.subr.mxu0 0.0
        %289 = vmatpush2.msra.mxu0 0.0
        %290 = vmatprep.subr.mxu0 0.0
        %291 = vmatpush2.msra.mxu0 0.0
        %292 = vmatprep.subr.mxu0 0.0
        %293 = vmatpush2.msra.mxu0 0.0
        %294 = vmatprep.subr.mxu0 0.0
        %295 = vmatpush2.msra.mxu0 0.0
        %296 = vmatprep.subr.mxu0 0.0
        %297 = vmatpush2.msra.mxu0 0.0
        %298 = vmatprep.subr.mxu0 0.0
        %299 = vmatpush2.msra.mxu0 0.0
        %300 = vmatprep.subr.mxu0 0.0
        %301 = vmatpush2.msra.mxu0 0.0
        %302 = vmatprep.subr.mxu0 0.0
        %303 = vmatpush2.msra.mxu0 0.0
        %304 = vmatprep.subr.mxu0 0.0
        %305 = vmatpush2.msra.mxu0 0.0
        %306 = vmatprep.mubr.f32.mxu0 0.0
        %307 = vmatmul.mubr.f32.gmra.mxu0 %v237
        %v308 = vpop.f32.mrf.mxu0
        %v309 = vadd.f32 0.0, %v308
        %v310 = vpop.f32.mrf.mxu0
        %311 = vmatprep.mubr.f32.mxu0 0.0
        %312 = vmatmul.mubr.f32.gmra.mxu0 %v240
        %v313 = vpop.f32.mrf.mxu0
        %v314 = vadd.f32 0.0, %v313
        %v315 = vpop.f32.mrf.mxu0
        %316 = vdwg.mxu0
        %v317 = vadd.f32 %v201, %v309
        %v318 = vadd.f32 %v202, %v314
        %vm319 = vcmask 130048
        %320 = vst.msk [vmem:[#allocation2] sm:$0xff] %vm319, %v317
        %321 = vst.msk [vmem:[#allocation2 + $0x8] sm:$0xff] %vm319, %v318
        %s322 = scalar_lea.vmem %s178, 64
        %v323 = vld [vmem:[%s322] sm:$0xff]
        %v324 = vld [vmem:[%s322 + $0x8] sm:$0xff]
        %v325 = vld [vmem:[%s322 + $0x10] sm:$0xff]
        %v326 = vld [vmem:[%s322 + $0x18] sm:$0xff]
        %v327 = vld [vmem:[%s322 + $0x20] sm:$0xff]
        %v328 = vld [vmem:[%s322 + $0x28] sm:$0xff]
        %v329 = vld [vmem:[%s322 + $0x30] sm:$0xff]
        %v330 = vld [vmem:[%s322 + $0x38] sm:$0xff]
        %s331 = scalar_lea.vmem [#allocation2], 16
        %v332 = vld [vmem:[%s331] sm:$0xff]
        %v333 = vld [vmem:[%s331 + $0x8] sm:$0xff]
        %334 = vxpose.xlu0.b32.start [1/16] %v323, 128
        %335 = vxpose.xlu0.b32.cont [2/16] %v324, 128
        %336 = vxpose.xlu0.b32.cont [3/16] %v325, 128
        %337 = vxpose.xlu0.b32.cont [4/16] %v326, 128
        %338 = vxpose.xlu0.b32.cont [5/16] %v327, 128
        %339 = vxpose.xlu0.b32.cont [6/16] %v328, 128
        %340 = vxpose.xlu0.b32.cont [7/16] %v329, 128
        %341 = vxpose.xlu0.b32.cont [8/16] %v330, 128
        %342 = vxpose.xlu0.b32.cont [9/16] 0.0, 128
        %343 = vxpose.xlu0.b32.cont [10/16] 0.0, 128
        %344 = vxpose.xlu0.b32.cont [11/16] 0.0, 128
        %345 = vxpose.xlu0.b32.cont [12/16] 0.0, 128
        %346 = vxpose.xlu0.b32.cont [13/16] 0.0, 128
        %347 = vxpose.xlu0.b32.cont [14/16] 0.0, 128
        %348 = vxpose.xlu0.b32.cont [15/16] 0.0, 128
        %349 = vxpose.xlu0.b32.end [16/16] 0.0, 128
        %v350 = vpop.trf.xlu0
        %v351 = vpop.trf.xlu0
        %v352 = vpop.trf.xlu0
        %v353 = vpop.trf.xlu0
        %v354 = vpop.trf.xlu0
        %v355 = vpop.trf.xlu0
        %v356 = vpop.trf.xlu0
        %v357 = vpop.trf.xlu0
        %v358 = vpop.trf.xlu0
        %v359 = vpop.trf.xlu0
        %v360 = vpop.trf.xlu0
        %v361 = vpop.trf.xlu0
        %v362 = vpop.trf.xlu0
        %v363 = vpop.trf.xlu0
        %v364 = vpop.trf.xlu0
        %v365 = vpop.trf.xlu0
        %v367 = vsel %vm235, %v350, 0
        %v370 = vsel %vm235, %v351, 0
        %372 = vmatprep.subr.mxu0 0.0
        %373 = vmatpush1.msra.mxu0 0.0
        %374 = vmatprep.subr.mxu0 0.0
        %375 = vmatpush1.msra.mxu0 0.0
        %376 = vmatprep.subr.mxu0 0.0
        %377 = vmatpush1.msra.mxu0 0.0
        %378 = vmatprep.subr.mxu0 0.0
        %379 = vmatpush1.msra.mxu0 0.0
        %380 = vmatprep.subr.mxu0 0.0
        %381 = vmatpush1.msra.mxu0 0.0
        %382 = vmatprep.subr.mxu0 0.0
        %383 = vmatpush1.msra.mxu0 0.0
        %384 = vmatprep.subr.mxu0 0.0
        %385 = vmatpush1.msra.mxu0 0.0
        %386 = vmatprep.subr.mxu0 0.0
        %387 = vmatpush1.msra.mxu0 0.0
        %388 = vmatprep.subr.mxu0 0.0
        %389 = vmatpush1.msra.mxu0 %v330
        %390 = vmatprep.subr.mxu0 0.0
        %391 = vmatpush1.msra.mxu0 %v329
        %392 = vmatprep.subr.mxu0 0.0
        %393 = vmatpush1.msra.mxu0 %v328
        %394 = vmatprep.subr.mxu0 0.0
        %395 = vmatpush1.msra.mxu0 %v327
        %396 = vmatprep.subr.mxu0 0.0
        %397 = vmatpush1.msra.mxu0 %v326
        %398 = vmatprep.subr.mxu0 0.0
        %399 = vmatpush1.msra.mxu0 %v325
        %400 = vmatprep.subr.mxu0 0.0
        %401 = vmatpush1.msra.mxu0 %v324
        %402 = vmatprep.subr.mxu0 0.0
        %403 = vmatpush1.msra.mxu0 %v323
        %404 = vmatprep.subr.mxu0 0.0
        %405 = vmatpush2.msra.mxu0 0.0
        %406 = vmatprep.subr.mxu0 0.0
        %407 = vmatpush2.msra.mxu0 0.0
        %408 = vmatprep.subr.mxu0 0.0
        %409 = vmatpush2.msra.mxu0 0.0
        %410 = vmatprep.subr.mxu0 0.0
        %411 = vmatpush2.msra.mxu0 0.0
        %412 = vmatprep.subr.mxu0 0.0
        %413 = vmatpush2.msra.mxu0 0.0
        %414 = vmatprep.subr.mxu0 0.0
        %415 = vmatpush2.msra.mxu0 0.0
        %416 = vmatprep.subr.mxu0 0.0
        %417 = vmatpush2.msra.mxu0 0.0
        %418 = vmatprep.subr.mxu0 0.0
        %419 = vmatpush2.msra.mxu0 0.0
        %420 = vmatprep.subr.mxu0 0.0
        %421 = vmatpush2.msra.mxu0 0.0
        %422 = vmatprep.subr.mxu0 0.0
        %423 = vmatpush2.msra.mxu0 0.0
        %424 = vmatprep.subr.mxu0 0.0
        %425 = vmatpush2.msra.mxu0 0.0
        %426 = vmatprep.subr.mxu0 0.0
        %427 = vmatpush2.msra.mxu0 0.0
        %428 = vmatprep.subr.mxu0 0.0
        %429 = vmatpush2.msra.mxu0 0.0
        %430 = vmatprep.subr.mxu0 0.0
        %431 = vmatpush2.msra.mxu0 0.0
        %432 = vmatprep.subr.mxu0 0.0
        %433 = vmatpush2.msra.mxu0 0.0
        %434 = vmatprep.subr.mxu0 0.0
        %435 = vmatpush2.msra.mxu0 0.0
        %436 = vmatprep.mubr.f32.mxu0 0.0
        %437 = vmatmul.mubr.f32.gmra.mxu0 %v367
        %v438 = vpop.f32.mrf.mxu0
        %v439 = vadd.f32 0.0, %v438
        %v440 = vpop.f32.mrf.mxu0
        %441 = vmatprep.mubr.f32.mxu0 0.0
        %442 = vmatmul.mubr.f32.gmra.mxu0 %v370
        %v443 = vpop.f32.mrf.mxu0
        %v444 = vadd.f32 0.0, %v443
        %v445 = vpop.f32.mrf.mxu0
        %446 = vdwg.mxu0
        %v447 = vadd.f32 %v332, %v439
        %v448 = vadd.f32 %v333, %v444
        %449 = vst.msk [vmem:[%s331] sm:$0xff] %vm319, %v447
        %450 = vst.msk [vmem:[%s331 + $0x8] sm:$0xff] %vm319, %v448
        // Predicated region
        $region29: #{tpu_custom_call.1} parent=23 // pred_check
          %p451 = pneg %p184
        $region30: #{tpu_custom_call.1} parent=23 // pred_check_branch
          %453 = sbr.rel (%p451) target = $region32
        $region31: #{tpu_custom_call.1} parent=23 // pred_region
          %454 = vst.msk [vmem:[%s163] sm:$0xff] %vm319, 0.0
          %455 = vst.msk [vmem:[%s163 + $0x8] sm:$0xff] %vm319, 0.0
          %v456 = vld [vmem:[#allocation2] sm:$0xff]
          %v457 = vld [vmem:[#allocation2 + $0x8] sm:$0xff]
          %v458 = vmul.f32 %v456, %v456
          %v459 = vmul.f32 %v457, %v457
          %v460 = vsel %vm319, %v458, 0.0
          %v461 = vsel %vm319, %v459, 0.0
          %v462 = vadd.f32 %v460, %v461
          %463 = vadd.xlane.f32.xlu0 %v462
          %v464 = vpop.xlane.xlu0 %463
          %v465 = vrot.slane %v464, 4
          %v466 = vadd.f32 %v464, %v465
          %v467 = vrot.slane %v466, 2
          %v468 = vadd.f32 %v466, %v467
          %v469 = vrot.slane %v468, 1
          %v470 = vadd.f32 %v468, %v469
          %s471 = vtos %v470
          %v472 = vstv %s471
          %v473 = vmax.f32 %v472, 1e-24
          %v474 = vrsqrt.pop %v473
          %v475 = vld [vmem:[%s163] sm:$0xff]
          %v476 = vld [vmem:[%s163 + $0x8] sm:$0xff]
          %v477 = vmul.f32 %v456, %v474
          %v478 = vmul.f32 %v457, %v474
          %v479 = vadd.f32 %v475, %v477
          %v480 = vadd.f32 %v476, %v478
          %481 = vst.msk [vmem:[%s163] sm:$0xff] %vm319, %v479
          %482 = vst.msk [vmem:[%s163 + $0x8] sm:$0xff] %vm319, %v480
          %v483 = vmul.f32 %v472, %v474
          %v484 = vmul.f32 %v483, %v474
          %v485 = vadd.f32 %v484, 0.0
          %v486 = vld [vmem:[%s331] sm:$0xff]
          %v487 = vld [vmem:[%s331 + $0x8] sm:$0xff]
          %v488 = vmul.f32 %v486, %v486
          %v489 = vmul.f32 %v487, %v487
          %v490 = vsel %vm319, %v488, 0.0
          %v491 = vsel %vm319, %v489, 0.0
          %v492 = vadd.f32 %v490, %v491
          %493 = vadd.xlane.f32.xlu0 %v492
          %v494 = vpop.xlane.xlu0 %493
          %v495 = vrot.slane %v494, 4
          %v496 = vadd.f32 %v494, %v495
          %v497 = vrot.slane %v496, 2
          %v498 = vadd.f32 %v496, %v497
          %v499 = vrot.slane %v498, 1
          %v500 = vadd.f32 %v498, %v499
          %s501 = vtos %v500
          %v502 = vstv %s501
          %v503 = vmax.f32 %v502, 1e-24
          %v504 = vrsqrt.pop %v503
          %v505 = vld [vmem:[%s163] sm:$0xff]
          %v506 = vld [vmem:[%s163 + $0x8] sm:$0xff]
          %v507 = vmul.f32 %v486, %v504
          %v508 = vmul.f32 %v487, %v504
          %v509 = vadd.f32 %v505, %v507
          %v510 = vadd.f32 %v506, %v508
          %511 = vst.msk [vmem:[%s163] sm:$0xff] %vm319, %v509
          %512 = vst.msk [vmem:[%s163 + $0x8] sm:$0xff] %vm319, %v510
          %v513 = vmul.f32 %v502, %v504
          %v514 = vmul.f32 %v513, %v504
          %v515 = vadd.f32 %v485, %v514
          %vm516 = vcmask 0
          %517 = vst.msk [vmem:[%s183] sm:$0x1] %vm516, %v515
        $region32: #{tpu_custom_call.1} parent=23 // pred_fallthru
          _
        %s518 = sand.u32 %s65, 1
        %s519 = scalar_lea.sflag [#allocation4], %s518
        %s520 = sand.u32 %s65, 1
        %s521 = smul.addr %s520, 16
        %s522 = scalar_lea.vmem [#allocation3], %s521
        %p523 = scmp.lt.s32.totalorder %s21, 1
        %s524 = scalar_select %p523, %s21, 1
        %s525 = scalar_lea.vmem %s2, %s524
        // Predicated region
        $region33: #{tpu_custom_call.1} parent=23 // pred_check
          %p526 = pneg %p75
        $region34: #{tpu_custom_call.1} parent=23 // pred_check_branch
          %528 = sbr.rel (%p526) target = $region36
        $region35: #{tpu_custom_call.1} parent=23 // pred_region
          %s530 = ssub.s32 256, 256
          %531 = vsyncadd %s519, %s530
          %s532 = smul.addr %s21, 2
          %s533 = smul.addr %s532, 128
          %s534 = scalar_lea.hbm %s1, %s533
          %s535 = sshll.u32 %s522, 4
          %s536 = int_to_ptr.vmem [resolvable:$true] %s535
          %541 = dma.vmem_to_hbm [thread:$0]  %s536, 256, %s534, %s519, 128, 128, 8
        $region36: #{tpu_custom_call.1} parent=23 // pred_fallthru
          _
        // Predicated region
        $region37: #{tpu_custom_call.1} parent=23 // pred_check
          %p542 = pneg %p101
        $region38: #{tpu_custom_call.1} parent=23 // pred_check_branch
          %544 = sbr.rel (%p542) target = $region40
        $region39: #{tpu_custom_call.1} parent=23 // pred_region
          _
        $region40: #{tpu_custom_call.1} parent=23 // pred_fallthru
          _
      $region24: #{tpu_custom_call.1} parent=5 // pred_fallthru
        _
      %p545 = scmp.le.s32.totalorder 2, %s12
      // Predicated region
      $region41: #{tpu_custom_call.1} parent=5 // pred_check
        %p546 = pneg %p545
      $region42: #{tpu_custom_call.1} parent=5 // pred_check_branch
        %548 = sbr.rel (%p546) target = $region44
      $region43: #{tpu_custom_call.1} parent=5 // pred_region
        %s549 = ssub.s32 %s12, 2
        // Predicated region
        $region45: #{tpu_custom_call.1} parent=43 // pred_check
          %p550 = pneg %p81
        $region46: #{tpu_custom_call.1} parent=43 // pred_check_branch
          %552 = sbr.rel (%p550) target = $region48
        $region47: #{tpu_custom_call.1} parent=43 // pred_region
          %s553 = sand.u32 %s66, 1
          %s554 = scalar_lea.sflag [#allocation4], %s553
          %s555 = sand.u32 %s66, 1
          %s556 = smul.addr %s555, 16
          %s557 = scalar_lea.vmem [#allocation3], %s556
          %558 = dma.done %s554, 256
        $region48: #{tpu_custom_call.1} parent=43 // pred_fallthru
          _
        // Predicated region
        $region49: #{tpu_custom_call.1} parent=43 // pred_check
          %p559 = pneg %p107
        $region50: #{tpu_custom_call.1} parent=43 // pred_check_branch
          %561 = sbr.rel (%p559) target = $region52
        $region51: #{tpu_custom_call.1} parent=43 // pred_region
          %p562 = scmp.lt.s32.totalorder %s23, 1
          %s563 = scalar_select %p562, %s23, 1
          %s564 = scalar_lea.vmem %s2, %s563
        $region52: #{tpu_custom_call.1} parent=43 // pred_fallthru
          _
      $region44: #{tpu_custom_call.1} parent=5 // pred_fallthru
        _
    $region6: #{tpu_custom_call.1} parent=1 // loop_footer
      %s16 = sadd.s32 1, %s12
    $region7: #{tpu_custom_call.1} parent=1 // loop_footer_branch
      %11 = sbr.rel target = $region3
    $region8: #{tpu_custom_call.1} parent=1 // loop_exit
      _
    %565 = vsyncpa [#allocation4], 1
    %s566 = scalar_lea.sflag [#allocation4], 1
    %567 = vsyncpa %s566, 1

</llo_original>
